<compile_context>
chip_gen: v6e
topology: v6e:2x2x1
jax: 0.10.0
libtpu: 0.0.40
codegen_flags: <defaults>
</compile_context>

<pallas_src>
import jax
import jax.numpy as jnp
from jax.experimental import pallas as pl
from jax.experimental.pallas import tpu as pltpu


def _make_dma_concat_kernel(offsets, lengths):
    """Kernel: one strided HBM->HBM async copy per input into its lane slice."""
    n = len(lengths)

    def kernel(*refs):
        in_refs = refs[:n]          # raw HBM refs (memory_space=pl.ANY)
        out_ref = refs[n]           # raw HBM ref
        sem = refs[n + 1]           # DMA semaphore array, one per input
        copies = []
        for i, (x_ref, off, ln) in enumerate(zip(in_refs, offsets, lengths)):
            cp = pltpu.make_async_copy(
                x_ref, out_ref.at[:, off:off + ln], sem.at[i])
            cp.start()              # issue all DMAs first -> they overlap
            copies.append(cp)
        for cp in copies:
            cp.wait()

    return kernel


def concat_forward(xs, dimension=1, min_pallas_bytes=0):
    """Pallas equivalent of torch.cat(xs, dim=dimension).

    Inputs must agree on every axis except `dimension`. Mixed dtypes are
    promoted with jnp.result_type (only mismatched inputs pay an extra cast
    pass).  For total sizes below `min_pallas_bytes` falls back to
    jnp.concatenate (XLA's native concat fusion wins for tiny tensors).
    """
    xs = list(xs)
    assert len(xs) >= 1, "Concat needs at least one input"
    ndim = xs[0].ndim
    d = dimension % ndim if ndim else 0

    shapes = [tuple(x.shape) for x in xs]
    for s in shapes:
        assert len(s) == ndim, "all inputs must have the same rank"
        assert s[:d] == shapes[0][:d] and s[d + 1:] == shapes[0][d + 1:], (
            "inputs must match on every axis except the concat axis")

    out_dtype = jnp.result_type(*[x.dtype for x in xs])
    out_shape = list(shapes[0])
    out_shape[d] = sum(s[d] for s in shapes)
    out_shape = tuple(out_shape)

    if len(xs) == 1:
        return xs[0].astype(out_dtype)

    # cat along dim d of contiguous row-major tensors == lane-axis concat of
    # 2-D views: rows = prod(shape[:d]) (shared), cols_i = prod(shape[d:]).
    rows = 1
    for s in shapes[0][:d]:
        rows *= s

    lengths, xs2d = [], []
    for x in xs:
        cols = 1
        for s in x.shape[d:]:
            cols *= s
        lengths.append(cols)
        xi = x if x.dtype == out_dtype else x.astype(out_dtype)
        xs2d.append(xi.reshape(rows, cols))  # free reshape (collapse dims)

    offsets, off = [], 0
    for ln in lengths:
        offsets.append(off)
        off += ln
    total_cols = off

    itemsize = jnp.dtype(out_dtype).itemsize
    total_bytes = rows * total_cols * itemsize
    if total_bytes < min_pallas_bytes:
        return jnp.concatenate(xs, axis=d).astype(out_dtype)

    n = len(xs)
    kernel = _make_dma_concat_kernel(offsets, lengths)

    out2d = pl.pallas_call(
        kernel,
        out_shape=jax.ShapeDtypeStruct((rows, total_cols), out_dtype),
        in_specs=[pl.BlockSpec(memory_space=pl.ANY) for _ in range(n)],
        out_specs=pl.BlockSpec(memory_space=pl.ANY),
        scratch_shapes=[pltpu.SemaphoreType.DMA((n,))],
        compiler_params=pltpu.CompilerParams(has_side_effects=True),
        cost_estimate=pl.CostEstimate(
            flops=0, transcendentals=0, bytes_accessed=2 * total_bytes),
    )(*xs2d)

    return out2d.reshape(out_shape)


def concat_reference(xs, dimension=1):
    """Pure-JAX reference mirroring torch.cat(xs, dim=dimension)."""
    return jnp.concatenate(xs, axis=dimension)


if __name__ == "__main__":
    key = jax.random.PRNGKey(0)
    k1, k2 = jax.random.split(key, 2)

    # Small NCHW feature maps concatenated along the channel axis (dim=1),
    # heterogeneous channel counts like a real Concat layer would see.
    x1 = jax.random.normal(k1, (2, 4, 16, 16), dtype=jnp.float32)
    x2 = jax.random.normal(k2, (2, 6, 16, 16), dtype=jnp.float32)

    out = concat_forward([x1, x2], dimension=1)
    out = jax.block_until_ready(out)

    ref = concat_reference([x1, x2], dimension=1)
    assert out.shape == (2, 10, 16, 16)
    assert out.dtype == ref.dtype
    assert jnp.array_equal(out, ref)

    print("KERNEL_OK")
</pallas_src>

<mosaic_0001>
module attributes {stable_mosaic.version = 11 : i64} {
  func.func @kernel(%arg0: memref<2x1024xf32, #tpu.memory_space<any>>, %arg1: memref<2x1536xf32, #tpu.memory_space<any>>, %arg2: memref<2x2560xf32, #tpu.memory_space<any>>, %arg3: memref<2x!tpu.dma_semaphore, #tpu.memory_space<semaphore_mem>>) attributes {dimension_semantics = [], scalar_prefetch = 0 : i64, scratch_operands = 1 : i64, tpu.core_type = #tpu.core_type<tc>} {
    %c0_i32 = arith.constant 0 : i32
    %c0_i32_0 = arith.constant 0 : i32
    %c0_i32_1 = arith.constant 0 : i32
    %0 = tpu.memref_slice %arg2[%c0_i32_0, %c0_i32_1] : memref<2x2560xf32, #tpu.memory_space<any>> -> memref<2x1024xf32, #tpu.memory_space<any>>
    %1 = tpu.memref_slice %arg3[%c0_i32] : memref<2x!tpu.dma_semaphore, #tpu.memory_space<semaphore_mem>> -> memref<1x!tpu.dma_semaphore, #tpu.memory_space<semaphore_mem>>
    %2 = tpu.memref_squeeze %1 : memref<1x!tpu.dma_semaphore, #tpu.memory_space<semaphore_mem>> -> memref<!tpu.dma_semaphore, #tpu.memory_space<semaphore_mem>>
    tpu.enqueue_dma source(%arg0 : memref<2x1024xf32, #tpu.memory_space<any>>) target(%0 : memref<2x1024xf32, #tpu.memory_space<any>>) target_semaphore(%2 : memref<!tpu.dma_semaphore, #tpu.memory_space<semaphore_mem>>)
    %c1_i32 = arith.constant 1 : i32
    %c0_i32_2 = arith.constant 0 : i32
    %c1024_i32 = arith.constant 1024 : i32
    %3 = tpu.memref_slice %arg2[%c0_i32_2, %c1024_i32] : memref<2x2560xf32, #tpu.memory_space<any>> -> memref<2x1536xf32, #tpu.memory_space<any>>
    %4 = tpu.memref_slice %arg3[%c1_i32] : memref<2x!tpu.dma_semaphore, #tpu.memory_space<semaphore_mem>> -> memref<1x!tpu.dma_semaphore, #tpu.memory_space<semaphore_mem>>
    %5 = tpu.memref_squeeze %4 : memref<1x!tpu.dma_semaphore, #tpu.memory_space<semaphore_mem>> -> memref<!tpu.dma_semaphore, #tpu.memory_space<semaphore_mem>>
    tpu.enqueue_dma source(%arg1 : memref<2x1536xf32, #tpu.memory_space<any>>) target(%3 : memref<2x1536xf32, #tpu.memory_space<any>>) target_semaphore(%5 : memref<!tpu.dma_semaphore, #tpu.memory_space<semaphore_mem>>)
    %c0_i32_3 = arith.constant 0 : i32
    %c0_i32_4 = arith.constant 0 : i32
    %c0_i32_5 = arith.constant 0 : i32
    %6 = tpu.memref_slice %arg2[%c0_i32_4, %c0_i32_5] : memref<2x2560xf32, #tpu.memory_space<any>> -> memref<2x1024xf32, #tpu.memory_space<any>>
    %7 = tpu.memref_slice %arg3[%c0_i32_3] : memref<2x!tpu.dma_semaphore, #tpu.memory_space<semaphore_mem>> -> memref<1x!tpu.dma_semaphore, #tpu.memory_space<semaphore_mem>>
    %8 = tpu.memref_squeeze %7 : memref<1x!tpu.dma_semaphore, #tpu.memory_space<semaphore_mem>> -> memref<!tpu.dma_semaphore, #tpu.memory_space<semaphore_mem>>
    tpu.wait_dma2 semaphore(%8 : memref<!tpu.dma_semaphore, #tpu.memory_space<semaphore_mem>>) src(%arg0 : memref<2x1024xf32, #tpu.memory_space<any>>) dst(%6 : memref<2x1024xf32, #tpu.memory_space<any>>)
    %c1_i32_6 = arith.constant 1 : i32
    %c0_i32_7 = arith.constant 0 : i32
    %c1024_i32_8 = arith.constant 1024 : i32
    %9 = tpu.memref_slice %arg2[%c0_i32_7, %c1024_i32_8] : memref<2x2560xf32, #tpu.memory_space<any>> -> memref<2x1536xf32, #tpu.memory_space<any>>
    %10 = tpu.memref_slice %arg3[%c1_i32_6] : memref<2x!tpu.dma_semaphore, #tpu.memory_space<semaphore_mem>> -> memref<1x!tpu.dma_semaphore, #tpu.memory_space<semaphore_mem>>
    %11 = tpu.memref_squeeze %10 : memref<1x!tpu.dma_semaphore, #tpu.memory_space<semaphore_mem>> -> memref<!tpu.dma_semaphore, #tpu.memory_space<semaphore_mem>>
    tpu.wait_dma2 semaphore(%11 : memref<!tpu.dma_semaphore, #tpu.memory_space<semaphore_mem>>) src(%arg1 : memref<2x1536xf32, #tpu.memory_space<any>>) dst(%9 : memref<2x1536xf32, #tpu.memory_space<any>>)
    return
  }
}

</mosaic_0001>

<llo_original>
// kernel: tpu_custom_call.1
$region0: #{tpu_custom_call.1}
  #allocation0 [shape = 'u32[]', space=smem, size = 0x4, offset = 0x4, fixed_abs, tag = 'smem constant byte address 0x4 - core index']
  #allocation1 [shape = 'u32[144,128]{1,0:T(1,128)}', space=vmem, size = 0x12000, scoped, tag = 'internal scratch']
  #allocation2 [shape = 's32[2]{0}', space=sflag, size = 0x8, scoped, tag = 'scratch operand']
  #allocation3 [shape = 's32[]', space=sflag, size = 0x4, offset = 0, fixed_abs, tag = 'sflag constant byte address 0x0 - dummy sync flag']
  #allocation4 [shape = 'u32[0]{0}', space=smem, size = 0, offset = 0, fixed_abs, tag = 'smem constant byte address 0x0 - null']
  #allocation5 [shape = 's32[]', space=sflag, size = 0x4, offset = 0, fixed_abs, tag = 'sflag constant byte address 0x0 - dummy sync flag']
  #allocation6 [shape = 'u32[0]{0}', space=smem, size = 0, offset = 0, fixed_abs, tag = 'smem constant byte address 0x0 - null']
  %s0 = inlined_call_operand.hbm [shape: f32[2,1024], index: 0, kind: input, shape index: {}]
  %s1 = inlined_call_operand.hbm [shape: f32[2,1536], index: 1, kind: input, shape index: {}]
  %s2 = inlined_call_operand.hbm [shape: f32[2,2560], index: 2, kind: output, shape index: {}]
  %s3 = sld [smem:[#allocation0]]
  $region2: #{tpu_custom_call.1} parent=0
    _
  %s5 = ssub.s32 1, %s3
  %s6 = scalar_select 0, %s5, %s3
  %s8 = sshll.u32 1, 14
  %s9 = sxor.u32 4294967295, %s8
  %13 = dma.general %s0, 256, %s2, [#allocation2], 131072, [#allocation4], 0, 0
  %s14 = scalar_lea.hbm %s2, 256
  %s15 = scalar_lea.sflag [#allocation2], 1
  %s17 = sshll.u32 1, 14
  %s18 = sxor.u32 4294967295, %s17
  %22 = dma.general %s1, 384, %s14, %s15, 131072, [#allocation6], 0, 0
  %s23 = smul.u32 2, 1
  %s24 = smul.u32 %s23, 8
  %s25 = sshll.u32 %s24, 4
  %26 = dma.done [#allocation2], %s25
  %s27 = smul.u32 %s23, 12
  %s28 = sshll.u32 %s27, 4
  %29 = dma.done %s15, %s28
  %30 = vsyncmov [#allocation2]
  %s31 = vpop.sfrf %30
  %p32 = scmp.eq.s32.totalorder %s31, 0
  %p33 = pneg %p32
  %35 = shalt.err (%p33)
  %s36 = scalar_lea.sflag [#allocation2], 1
  %37 = vsyncmov %s36
  %s38 = vpop.sfrf %37
  %p39 = scmp.eq.s32.totalorder %s38, 0
  %p40 = pneg %p39
  %42 = shalt.err (%p40)

</llo_original>
